<compile_context>
chip_gen: v7x
topology: tpu7x:2x2x1
jax: 0.10.0
libtpu: 0.0.40
codegen_flags: <defaults>
</compile_context>

<pallas_src>
import math
import functools

import jax
import jax.numpy as jnp
from jax.experimental import pallas as pl
from jax.experimental.pallas import tpu as pltpu


def _round_up(x, m):
    return (x + m - 1) // m * m


# ----------------------------------------------------------------------------
# Tiled matmul: (M, K) @ (K, N) -> (M, N), bf16 operands, f32 accumulation.
# Grid = (M/tm, N/tn, K/tk); K is the reduction axis (last, "arbitrary").
# ----------------------------------------------------------------------------
def _matmul_kernel(a_ref, b_ref, o_ref, acc_ref):
    @pl.when(pl.program_id(2) == 0)
    def _init():
        acc_ref[...] = jnp.zeros_like(acc_ref)

    acc_ref[...] += jnp.dot(a_ref[...], b_ref[...],
                            preferred_element_type=jnp.float32)

    @pl.when(pl.program_id(2) == pl.num_programs(2) - 1)
    def _flush():
        o_ref[...] = acc_ref[...].astype(o_ref.dtype)


def pallas_matmul(a, b, out_dtype=None, tm=128, tn=256, tk=512):
    M, K = a.shape
    K2, N = b.shape
    assert K == K2
    out_dtype = out_dtype or a.dtype

    # Shrink tiles for small problems; keep (8, 128) alignment on last 2 dims.
    tm = min(tm, _round_up(M, 8))
    tn = min(tn, _round_up(N, 128))
    tk = min(tk, _round_up(K, 128))
    Mp, Np, Kp = _round_up(M, tm), _round_up(N, tn), _round_up(K, tk)
    if (Mp, Kp) != (M, K):
        a = jnp.pad(a, ((0, Mp - M), (0, Kp - K)))
    if (Kp, Np) != (K, N):
        b = jnp.pad(b, ((0, Kp - K), (0, Np - N)))

    out = pl.pallas_call(
        _matmul_kernel,
        out_shape=jax.ShapeDtypeStruct((Mp, Np), out_dtype),
        grid_spec=pltpu.PrefetchScalarGridSpec(
            num_scalar_prefetch=0,
            grid=(Mp // tm, Np // tn, Kp // tk),
            in_specs=[
                pl.BlockSpec((tm, tk), lambda i, j, k: (i, k)),
                pl.BlockSpec((tk, tn), lambda i, j, k: (k, j)),
            ],
            out_specs=pl.BlockSpec((tm, tn), lambda i, j, k: (i, j)),
            scratch_shapes=[pltpu.VMEM((tm, tn), jnp.float32)],
        ),
        compiler_params=pltpu.CompilerParams(
            dimension_semantics=("parallel", "parallel", "arbitrary"),
            vmem_limit_bytes=48 * 1024 * 1024,
        ),
    )(a, b)
    return out[:M, :N]


# ----------------------------------------------------------------------------
# Flash attention, one (batch, kv-head group) per (b, g) grid step; KV axis
# tiled on the last grid axis with an online-softmax accumulator in VMEM.
# GQA: the n_rep query heads of a group are folded into the matmul M dim.
# ----------------------------------------------------------------------------
def _flash_attn_kernel(pos_ref, q_ref, k_ref, v_ref, o_ref,
                       m_scr, l_scr, acc_scr, *, scale, causal, n_rep):
    kv_i = pl.program_id(2)
    tkv = k_ref.shape[0]

    @pl.when(kv_i == 0)
    def _init():
        m_scr[...] = jnp.full_like(m_scr, -jnp.inf)
        l_scr[...] = jnp.zeros_like(l_scr)
        acc_scr[...] = jnp.zeros_like(acc_scr)

    q = q_ref[...]                                     # (n_rep*S, hd) bf16
    k = k_ref[...]                                     # (tkv, hd) bf16
    v = v_ref[...]                                     # (tkv, hd) bf16
    M = q.shape[0]
    s_q = M // n_rep

    s = jnp.dot(q, k.T, preferred_element_type=jnp.float32) * scale  # (M, tkv)

    # In-kernel causal / valid-length mask (no mask tensor read from HBM).
    # Rows are rep-major: row = r * S + s  ->  query position = start + row % S.
    start_pos = pos_ref[0]
    kv_len = pos_ref[1]
    col = jax.lax.broadcasted_iota(jnp.int32, (M, tkv), 1)
    k_pos = kv_i * tkv + col
    valid = k_pos < kv_len
    if causal:
        row = jax.lax.broadcasted_iota(jnp.int32, (M, tkv), 0)
        q_pos = start_pos + row % s_q
        valid = jnp.logical_and(valid, k_pos <= q_pos)
    s = jnp.where(valid, s, -1e30)

    # Online softmax update.
    m_prev = m_scr[...]
    m_new = jnp.maximum(m_prev, jnp.max(s, axis=-1, keepdims=True))
    alpha = jnp.exp(m_prev - m_new)
    p = jnp.exp(s - m_new)
    l_scr[...] = alpha * l_scr[...] + jnp.sum(p, axis=-1, keepdims=True)
    acc_scr[...] = alpha * acc_scr[...] + jnp.dot(
        p.astype(v.dtype), v, preferred_element_type=jnp.float32)
    m_scr[...] = m_new

    @pl.when(kv_i == pl.num_programs(2) - 1)
    def _flush():
        inv_l = pl.reciprocal(l_scr[...], approx=True)
        o_ref[...] = (acc_scr[...] * inv_l).astype(o_ref.dtype)


def pallas_flash_attention(q, k, v, pos_info, n_rep, *, causal, tkv, n_kv_blocks):
    # q: (B, Hkv, n_rep*S, hd); k, v: (>=B, Hkv, Skv>=n_kv_blocks*tkv, hd)
    # pos_info: int32[2] = (start_pos, kv_len)  -- scalar-prefetched to SMEM.
    B, Hkv, M, hd = q.shape
    assert k.shape[0] >= B and k.shape[1] == Hkv and k.shape[3] == hd
    assert n_kv_blocks * tkv <= k.shape[2]
    scale = 1.0 / math.sqrt(hd)
    kernel = functools.partial(_flash_attn_kernel, scale=scale, causal=causal,
                               n_rep=n_rep)
    return pl.pallas_call(
        kernel,
        out_shape=jax.ShapeDtypeStruct((B, Hkv, M, hd), q.dtype),
        grid_spec=pltpu.PrefetchScalarGridSpec(
            num_scalar_prefetch=1,
            grid=(B, Hkv, n_kv_blocks),
            in_specs=[
                pl.BlockSpec((None, None, M, hd),
                             lambda b, g, kvi, pos: (b, g, 0, 0)),
                pl.BlockSpec((None, None, tkv, hd),
                             lambda b, g, kvi, pos: (b, g, kvi, 0)),
                pl.BlockSpec((None, None, tkv, hd),
                             lambda b, g, kvi, pos: (b, g, kvi, 0)),
            ],
            out_specs=pl.BlockSpec((None, None, M, hd),
                                   lambda b, g, kvi, pos: (b, g, 0, 0)),
            scratch_shapes=[
                pltpu.VMEM((M, 1), jnp.float32),    # running max
                pltpu.VMEM((M, 1), jnp.float32),    # running sum
                pltpu.VMEM((M, hd), jnp.float32),   # output accumulator
            ],
        ),
        compiler_params=pltpu.CompilerParams(
            dimension_semantics=("parallel", "parallel", "arbitrary"),
            vmem_limit_bytes=48 * 1024 * 1024,
        ),
    )(pos_info, q, k, v)


# ----------------------------------------------------------------------------
# Rotary embedding (interleaved pairs == torch.view_as_complex path).
# Elementwise glue kept in plain JAX; hot paths (GEMMs, softmax) are Pallas.
# ----------------------------------------------------------------------------
def apply_rotary_pos_emb(x, freqs_cos, freqs_sin):
    # x: (B, S, H, hd); freqs_*: (S, hd // 2)
    B, S, H, hd = x.shape
    xr = x.astype(jnp.float32).reshape(B, S, H, hd // 2, 2)
    x_re, x_im = xr[..., 0], xr[..., 1]
    c = freqs_cos[None, :, None, :]
    s = freqs_sin[None, :, None, :]
    o_re = x_re * c - x_im * s
    o_im = x_re * s + x_im * c
    out = jnp.stack([o_re, o_im], axis=-1).reshape(B, S, H, hd)
    return out.astype(x.dtype)


# ----------------------------------------------------------------------------
# Module equivalent (use_cache=True path of the PyTorch module).
# ----------------------------------------------------------------------------
class GroupedQueryAttentionLLAMAPallas:
    def __init__(self, dim, n_heads, n_kv_heads, max_batch_size, max_seq_len,
                 key, compute_dtype=jnp.bfloat16):
        self.n_heads_q = n_heads
        self.n_kv_heads = n_kv_heads
        self.n_rep = n_heads // n_kv_heads
        self.head_dim = dim // n_heads
        self.compute_dtype = compute_dtype

        k1, k2, k3, k4 = jax.random.split(key, 4)
        scale = 0.02
        # nn.Linear(in, out, bias=False).weight is (out, in); forward is x @ W.T
        self.wq = scale * jax.random.normal(k1, (n_heads * self.head_dim, dim), jnp.float32)
        self.wk = scale * jax.random.normal(k2, (n_kv_heads * self.head_dim, dim), jnp.float32)
        self.wv = scale * jax.random.normal(k3, (n_kv_heads * self.head_dim, dim), jnp.float32)
        self.wo = scale * jax.random.normal(k4, (dim, n_heads * self.head_dim), jnp.float32)

        # Fused QKV weight, pre-transposed to (dim, (Hq+2*Hkv)*hd), bf16 (MXU-native).
        self.w_qkv_t = jnp.concatenate([self.wq, self.wk, self.wv], axis=0).T.astype(compute_dtype)
        self.wo_t = self.wo.T.astype(compute_dtype)

        # Head-major bf16 KV cache (B, Hkv, Smax, hd): read directly by the kernel.
        self.cache_k = jnp.zeros((max_batch_size, n_kv_heads, max_seq_len, self.head_dim),
                                 compute_dtype)
        self.cache_v = jnp.zeros_like(self.cache_k)

    def __call__(self, x, freqs_cos, freqs_sin, start_pos, causal=True):
        # TODO(synk): cache update is attribute-based (eager); wrap functionally
        #             (donated buffers / input_output_aliases) for jit use.
        # TODO(synk): arbitrary dense attention masks are not supported in-kernel
        #             (causal / none only, as in the standard LLaMA decode path).
        B, S, dim = x.shape
        hd, Hq, Hkv, n_rep = self.head_dim, self.n_heads_q, self.n_kv_heads, self.n_rep
        cdt = self.compute_dtype
        kv_len = start_pos + S
        max_seq = self.cache_k.shape[2]

        # ---- fused QKV projection (one GEMM; x read from HBM once) ----
        x2 = x.reshape(B * S, dim).astype(cdt)
        qkv = pallas_matmul(x2, self.w_qkv_t, out_dtype=cdt)
        q = qkv[:, : Hq * hd].reshape(B, S, Hq, hd)
        k = qkv[:, Hq * hd:(Hq + Hkv) * hd].reshape(B, S, Hkv, hd)
        v = qkv[:, (Hq + Hkv) * hd:].reshape(B, S, Hkv, hd)

        q = apply_rotary_pos_emb(q, freqs_cos, freqs_sin)
        k = apply_rotary_pos_emb(k, freqs_cos, freqs_sin)

        # ---- KV cache write (head-major, bf16; only the new tokens move) ----
        k_hm = jnp.transpose(k, (0, 2, 1, 3)).astype(cdt)   # (B, Hkv, S, hd)
        v_hm = jnp.transpose(v, (0, 2, 1, 3)).astype(cdt)
        self.cache_k = jax.lax.dynamic_update_slice(self.cache_k, k_hm, (0, 0, start_pos, 0))
        self.cache_v = jax.lax.dynamic_update_slice(self.cache_v, v_hm, (0, 0, start_pos, 0))

        # ---- KV tiling: read the cache in place (no visible-slab copy) ----
        tkv = min(256, _round_up(kv_len, 8))
        n_kv_blocks = (kv_len + tkv - 1) // tkv
        if n_kv_blocks * tkv <= max_seq:
            keys, values = self.cache_k, self.cache_v       # kernel reads only needed tiles
        else:  # rare: last tile would run past the cache end -> pad a slab
            pad = n_kv_blocks * tkv - kv_len
            keys = jnp.pad(self.cache_k[:B, :, :kv_len], ((0, 0), (0, 0), (0, pad), (0, 0)))
            values = jnp.pad(self.cache_v[:B, :, :kv_len], ((0, 0), (0, 0), (0, pad), (0, 0)))

        # ---- flash attention: fold (n_rep, S) into the matmul M dimension ----
        qh = jnp.transpose(q, (0, 2, 1, 3)).reshape(B, Hkv, n_rep * S, hd).astype(cdt)
        pos_info = jnp.array([start_pos, kv_len], jnp.int32)
        causal_eff = causal and S > 1   # S==1: causal is implied by the kv_len mask
        attn = pallas_flash_attention(qh, keys, values, pos_info, n_rep,
                                      causal=causal_eff, tkv=tkv,
                                      n_kv_blocks=n_kv_blocks)
        attn = attn.reshape(B, Hq, S, hd)

        # ---- output projection ----
        out2 = jnp.transpose(attn, (0, 2, 1, 3)).reshape(B * S, Hq * hd)
        out = pallas_matmul(out2, self.wo_t, out_dtype=x.dtype).reshape(B, S, dim)
        return out


# ----------------------------------------------------------------------------
def make_freqs(head_dim, start_pos, seq_len, theta=10000.0):
    half = head_dim // 2
    inv_freq = theta ** (-jnp.arange(0, half, dtype=jnp.float32) * 2.0 / head_dim)
    pos = jnp.arange(start_pos, start_pos + seq_len, dtype=jnp.float32)
    angles = pos[:, None] * inv_freq[None, :]          # (S, hd//2)
    return jnp.cos(angles), jnp.sin(angles)


def reference_forward(mod, x, freqs_cos, freqs_sin, start_pos):
    """Plain-JAX f32 reference of the PyTorch forward (prefill, empty cache)."""
    B, S, dim = x.shape
    Hq, Hkv, hd, n_rep = mod.n_heads_q, mod.n_kv_heads, mod.head_dim, mod.n_rep
    x2 = x.reshape(B * S, dim)
    q = (x2 @ mod.wq.T).reshape(B, S, Hq, hd)
    k = (x2 @ mod.wk.T).reshape(B, S, Hkv, hd)
    v = (x2 @ mod.wv.T).reshape(B, S, Hkv, hd)
    q = apply_rotary_pos_emb(q, freqs_cos, freqs_sin)
    k = apply_rotary_pos_emb(k, freqs_cos, freqs_sin)
    keys = jnp.repeat(k, n_rep, axis=2)        # repeat_kv_heads
    vals = jnp.repeat(v, n_rep, axis=2)
    qh, kh, vh = (jnp.transpose(t, (0, 2, 1, 3)) for t in (q, keys, vals))
    scores = jnp.einsum("bhqd,bhkd->bhqk", qh, kh) / math.sqrt(hd)
    q_pos = start_pos + jnp.arange(S)[:, None]
    k_pos = jnp.arange(start_pos + S)[None, :]
    scores = jnp.where(k_pos <= q_pos, scores, -jnp.inf)
    p = jax.nn.softmax(scores, axis=-1)
    attn = jnp.einsum("bhqk,bhkd->bhqd", p, vh)
    out = jnp.transpose(attn, (0, 2, 1, 3)).reshape(B * S, Hq * hd)
    return (out @ mod.wo.T).reshape(B, S, dim)


if __name__ == "__main__":
    B, S, DIM = 2, 16, 128
    N_HEADS, N_KV_HEADS = 4, 2
    MAX_BATCH, MAX_SEQ = 4, 64
    START_POS = 0

    key = jax.random.PRNGKey(0)
    kx, kw, kd = jax.random.split(key, 3)

    x = jax.random.normal(kx, (B, S, DIM), jnp.float32)
    attn_mod = GroupedQueryAttentionLLAMAPallas(
        DIM, N_HEADS, N_KV_HEADS, MAX_BATCH, MAX_SEQ, kw)

    freqs_cos, freqs_sin = make_freqs(DIM // N_HEADS, START_POS, S)

    # Prefill (causal mask computed in-kernel from start_pos / kv_len).
    out = attn_mod(x, freqs_cos, freqs_sin, START_POS, causal=True)
    out = jax.block_until_ready(out)
    assert out.shape == (B, S, DIM)
    assert bool(jnp.all(jnp.isfinite(out)))

    # Check against an f32 plain-JAX reference (bf16 kernels -> loose tolerance).
    ref = reference_forward(attn_mod, x, freqs_cos, freqs_sin, START_POS)
    err = float(jnp.max(jnp.abs(out - ref)))
    denom = float(jnp.max(jnp.abs(ref))) + 1e-6
    assert err / denom < 0.08, (err, denom)

    # One decode step: single new token per sequence, reads the KV cache back.
    x_dec = jax.random.normal(kd, (B, 1, DIM), jnp.float32)
    cos_d, sin_d = make_freqs(DIM // N_HEADS, S, 1)
    out_dec = attn_mod(x_dec, cos_d, sin_d, start_pos=S, causal=True)
    out_dec = jax.block_until_ready(out_dec)
    assert out_dec.shape == (B, 1, DIM)
    assert bool(jnp.all(jnp.isfinite(out_dec)))

    print("KERNEL_OK")
</pallas_src>

<mosaic_0001>
module attributes {stable_mosaic.version = 11 : i64} {
  func.func @_matmul_kernel(%arg0: i32, %arg1: i32, %arg2: i32, %arg3: memref<32x128xbf16, #tpu.memory_space<vmem>>, %arg4: memref<128x256xbf16, #tpu.memory_space<vmem>>, %arg5: memref<32x256xbf16, #tpu.memory_space<vmem>>, %arg6: memref<32x256xf32, #tpu.memory_space<vmem>>) attributes {dimension_semantics = [#tpu.dimension_semantics<parallel>, #tpu.dimension_semantics<parallel>, #tpu.dimension_semantics<arbitrary>], iteration_bounds = array<i64: 1, 1, 1>, scalar_prefetch = 0 : i64, scratch_operands = 1 : i64, tpu.core_type = #tpu.core_type<tc>, window_params = [{transform_indices = @transform_0, window_bounds = array<i64: 32, 128>}, {transform_indices = @transform_1, window_bounds = array<i64: 128, 256>}, {transform_indices = @transform_2, window_bounds = array<i64: 32, 256>}]} {
    %c0_i32 = arith.constant 0 : i32
    %0 = arith.cmpi eq, %arg2, %c0_i32 : i32
    %1 = arith.extui %0 : i1 to i32
    %c0_i32_0 = arith.constant 0 : i32
    %2 = arith.cmpi ne, %1, %c0_i32_0 : i32
    scf.if %2 {
      %cst_10 = arith.constant 0.000000e+00 : f32
      %12 = vector.broadcast %cst_10 : f32 to vector<32x256xf32>
      %c0_11 = arith.constant 0 : index
      %c0_12 = arith.constant 0 : index
      %13 = vector.load %arg6[%c0_11, %c0_12] : memref<32x256xf32, #tpu.memory_space<vmem>>, vector<32x256xf32>
      tpu.vector_store %arg6[%c0_11, %c0_12], %12 {strides = array<i32>} : memref<32x256xf32, #tpu.memory_space<vmem>>, vector<32x256xf32>,
    } else {
    }
    %c0 = arith.constant 0 : index
    %c0_1 = arith.constant 0 : index
    %3 = vector.load %arg6[%c0, %c0_1] : memref<32x256xf32, #tpu.memory_space<vmem>>, vector<32x256xf32>
    %c0_2 = arith.constant 0 : index
    %c0_3 = arith.constant 0 : index
    %4 = vector.load %arg3[%c0_2, %c0_3] : memref<32x128xbf16, #tpu.memory_space<vmem>>, vector<32x128xbf16>
    %c0_4 = arith.constant 0 : index
    %c0_5 = arith.constant 0 : index
    %5 = vector.load %arg4[%c0_4, %c0_5] : memref<128x256xbf16, #tpu.memory_space<vmem>>, vector<128x256xbf16>
    %cst = arith.constant dense<0.000000e+00> : vector<32x256xf32>
    %6 = tpu.matmul %4, %5, %cst {dimension_numbers = #tpu.dot_dimension_numbers<[1], [0], [0], [1], [0, 0, 1, 1], [], []>} : vector<32x128xbf16>, vector<128x256xbf16>, vector<32x256xf32> -> vector<32x256xf32>
    %7 = arith.addf %3, %6 : vector<32x256xf32>
    %c0_6 = arith.constant 0 : index
    %c0_7 = arith.constant 0 : index
    %8 = vector.load %arg6[%c0_6, %c0_7] : memref<32x256xf32, #tpu.memory_space<vmem>>, vector<32x256xf32>
    tpu.vector_store %arg6[%c0_6, %c0_7], %7 {strides = array<i32>} : memref<32x256xf32, #tpu.memory_space<vmem>>, vector<32x256xf32>,
    %c0_i32_8 = arith.constant 0 : i32
    %9 = arith.cmpi eq, %arg2, %c0_i32_8 : i32
    %10 = arith.extui %9 : i1 to i32
    %c0_i32_9 = arith.constant 0 : i32
    %11 = arith.cmpi ne, %10, %c0_i32_9 : i32
    scf.if %11 {
      %c0_10 = arith.constant 0 : index
      %c0_11 = arith.constant 0 : index
      %12 = vector.load %arg6[%c0_10, %c0_11] : memref<32x256xf32, #tpu.memory_space<vmem>>, vector<32x256xf32>
      %13 = arith.truncf %12 : vector<32x256xf32> to vector<32x256xbf16>
      %c0_12 = arith.constant 0 : index
      %c0_13 = arith.constant 0 : index
      %14 = vector.load %arg5[%c0_12, %c0_13] : memref<32x256xbf16, #tpu.memory_space<vmem>>, vector<32x256xbf16>
      tpu.vector_store %arg5[%c0_12, %c0_13], %13 {strides = array<i32>} : memref<32x256xbf16, #tpu.memory_space<vmem>>, vector<32x256xbf16>,
    } else {
    }
    return
  }
  func.func @transform_0(%arg0: i32, %arg1: i32, %arg2: i32) -> (i32, i32) {
    %c0_i32 = arith.constant 0 : i32
    return %arg0, %arg2 : i32, i32
  }
  func.func @transform_1(%arg0: i32, %arg1: i32, %arg2: i32) -> (i32, i32) {
    %c0_i32 = arith.constant 0 : i32
    return %arg2, %arg1 : i32, i32
  }
  func.func @transform_2(%arg0: i32, %arg1: i32, %arg2: i32) -> (i32, i32) {
    %c0_i32 = arith.constant 0 : i32
    return %arg0, %arg1 : i32, i32
  }
}

</mosaic_0001>

<llo_original>
// kernel: tpu_custom_call.1
$region0: #{tpu_custom_call.1}
  #allocation0 [shape = 'u32[]', space=smem, size = 0x4, offset = 0x4, fixed_abs, tag = 'smem constant byte address 0x4 - core index']
  #allocation1 [shape = 'u32[144,128]{1,0:T(1,128)}', space=vmem, size = 0x12000, scoped, tag = 'internal scratch']
  #allocation2 [shape = 'f32[32,256]{1,0:T(8,128)}', space=vmem, size = 0x8000, scoped, tag = 'scratch operand']
  %s0 = inlined_call_operand.hbm [shape: bf16[32,128], index: 0, kind: input, shape index: {}]
  %s1 = inlined_call_operand.hbm [shape: bf16[128,256], index: 1, kind: input, shape index: {}]
  %s2 = inlined_call_operand.hbm [shape: bf16[32,256], index: 2, kind: output, shape index: {}]
  %s3 = sld [smem:[#allocation0]]
  $region34: #{tpu_custom_call.1} parent=0
    _
  %s5 = ssub.s32 1, %s3
  %s6 = scalar_select 0, %s5, %s3
  $region1: #{tpu_custom_call.1} parent=0
    #allocation3 [shape = 'u8[8192]{0}', space=vmem, size = 0x2000, scoped, tag = 'input window, operand 0, single buffered']
    #allocation4 [shape = 's32[1]{0}', space=sflag, size = 0x4, scoped, tag = 'scoped memory for tpu_custom_call.1']
    #allocation5 [shape = 's32[1]{0}', space=sflag, size = 0x4, scoped, tag = 'scoped memory for tpu_custom_call.1']
    #allocation6 [shape = 'u8[65536]{0}', space=vmem, size = 0x10000, scoped, tag = 'input window, operand 1, single buffered']
    #allocation7 [shape = 's32[1]{0}', space=sflag, size = 0x4, scoped, tag = 'scoped memory for tpu_custom_call.1']
    #allocation8 [shape = 'u8[16384]{0}', space=vmem, size = 0x4000, scoped, tag = 'output window, operand 0, single buffered']
    %7 = vsyncpa [#allocation4], 0
    %8 = vsyncpa [#allocation7], 0
    %9 = vsyncpa [#allocation5], 0
    // Predicated region
    $region2: #{tpu_custom_call.1} parent=1 // pred_check
      _
    $region3: #{tpu_custom_call.1} parent=1 // pred_check_branch
      %11 = sbr.rel (0) target = $region5
    $region4: #{tpu_custom_call.1} parent=1 // pred_region
      %s13 = ssub.s32 256, 256
      %14 = vsyncadd [#allocation4], %s13
      %s15 = sshll.u32 [#allocation3], 4
      %s16 = int_to_ptr.vmem [resolvable:$true] %s15
      %21 = dma.hbm_to_vmem [thread:$0]  %s0, 256, %s16, [#allocation4], 64, 64, 4
    $region5: #{tpu_custom_call.1} parent=1 // pred_fallthru
      _
    // Predicated region
    $region6: #{tpu_custom_call.1} parent=1 // pred_check
      _
    $region7: #{tpu_custom_call.1} parent=1 // pred_check_branch
      %23 = sbr.rel (0) target = $region9
    $region8: #{tpu_custom_call.1} parent=1 // pred_region
      %s25 = ssub.s32 2048, 2048
      %26 = vsyncadd [#allocation7], %s25
      %s27 = sshll.u32 [#allocation6], 4
      %s28 = int_to_ptr.vmem [resolvable:$true] %s27
      %33 = dma.hbm_to_vmem [thread:$0]  %s1, 2048, %s28, [#allocation7], 128, 128, 8
    $region9: #{tpu_custom_call.1} parent=1 // pred_fallthru
      _
    // Predicated region
    $region10: #{tpu_custom_call.1} parent=1 // pred_check
      _
    $region11: #{tpu_custom_call.1} parent=1 // pred_check_branch
      %35 = sbr.rel (0) target = $region13
    $region12: #{tpu_custom_call.1} parent=1 // pred_region
      %36 = dma.done [#allocation4], 256
    $region13: #{tpu_custom_call.1} parent=1 // pred_fallthru
      _
    // Predicated region
    $region14: #{tpu_custom_call.1} parent=1 // pred_check
      _
    $region15: #{tpu_custom_call.1} parent=1 // pred_check_branch
      %38 = sbr.rel (0) target = $region17
    $region16: #{tpu_custom_call.1} parent=1 // pred_region
      %39 = dma.done [#allocation7], 2048
    $region17: #{tpu_custom_call.1} parent=1 // pred_fallthru
      _
    %p41 = scmp.eq.s32.totalorder 0, 0
    // Predicated region
    $region18: #{tpu_custom_call.1} parent=1 // pred_check
      %p42 = pneg %p41
    $region19: #{tpu_custom_call.1} parent=1 // pred_check_branch
      %44 = sbr.rel (%p42) target = $region21
    $region20: #{tpu_custom_call.1} parent=1 // pred_region
      %45 = vst [vmem:[#allocation2] sm:$0xff] 0.0
      %46 = vst [vmem:[#allocation2 + $0x8] sm:$0xff] 0.0
      %47 = vst [vmem:[#allocation2 + $0x10] sm:$0xff] 0.0
      %48 = vst [vmem:[#allocation2 + $0x18] sm:$0xff] 0.0
      %49 = vst [vmem:[#allocation2 + $0x20] sm:$0xff] 0.0
      %50 = vst [vmem:[#allocation2 + $0x28] sm:$0xff] 0.0
      %51 = vst [vmem:[#allocation2 + $0x30] sm:$0xff] 0.0
      %52 = vst [vmem:[#allocation2 + $0x38] sm:$0xff] 0.0
    $region21: #{tpu_custom_call.1} parent=1 // pred_fallthru
      _
    %v53 = vld [vmem:[#allocation2] sm:$0xff]
    %v54 = vld [vmem:[#allocation2 + $0x8] sm:$0xff]
    %v55 = vld [vmem:[#allocation2 + $0x10] sm:$0xff]
    %v56 = vld [vmem:[#allocation2 + $0x18] sm:$0xff]
    %v57 = vld [vmem:[#allocation2 + $0x20] sm:$0xff]
    %v58 = vld [vmem:[#allocation2 + $0x28] sm:$0xff]
    %v59 = vld [vmem:[#allocation2 + $0x30] sm:$0xff]
    %v60 = vld [vmem:[#allocation2 + $0x38] sm:$0xff]
    %v61 = vld [vmem:[#allocation3] sm:$0xf]
    %v62 = vld [vmem:[#allocation3 + $0x4] sm:$0xf]
    %v63 = vld [vmem:[#allocation3 + $0x8] sm:$0xf]
    %v64 = vld [vmem:[#allocation3 + $0xc] sm:$0xf]
    %v65 = vld [vmem:[#allocation6] sm:$0xff]
    %v66 = vld [vmem:[#allocation6 + $0x8] sm:$0xff]
    %v67 = vld [vmem:[#allocation6 + $0x10] sm:$0xff]
    %v68 = vld [vmem:[#allocation6 + $0x18] sm:$0xff]
    %v69 = vld [vmem:[#allocation6 + $0x20] sm:$0xff]
    %v70 = vld [vmem:[#allocation6 + $0x28] sm:$0xff]
    %v71 = vld [vmem:[#allocation6 + $0x30] sm:$0xff]
    %v72 = vld [vmem:[#allocation6 + $0x38] sm:$0xff]
    %v73 = vld [vmem:[#allocation6 + $0x40] sm:$0xff]
    %v74 = vld [vmem:[#allocation6 + $0x48] sm:$0xff]
    %v75 = vld [vmem:[#allocation6 + $0x50] sm:$0xff]
    %v76 = vld [vmem:[#allocation6 + $0x58] sm:$0xff]
    %v77 = vld [vmem:[#allocation6 + $0x60] sm:$0xff]
    %v78 = vld [vmem:[#allocation6 + $0x68] sm:$0xff]
    %v79 = vld [vmem:[#allocation6 + $0x70] sm:$0xff]
    %v80 = vld [vmem:[#allocation6 + $0x78] sm:$0xff]
    %v85 = vunpack.c.l.b16 %v61
    %v86 = vunpack.c.l.b16 %v62
    %v87 = vunpack.c.l.b16 %v63
    %v88 = vunpack.c.l.b16 %v64
    %v89 = vpack.c.b16 %v86, %v85
    %v90 = vpack.c.b16 %v88, %v87
    %v109 = vunpack.c.l.b16 %v65
    %v110 = vunpack.c.h.b16 %v65
    %v111 = vunpack.c.l.b16 %v66
    %v112 = vunpack.c.h.b16 %v66
    %v113 = vunpack.c.l.b16 %v67
    %v114 = vunpack.c.h.b16 %v67
    %v115 = vunpack.c.l.b16 %v68
    %v116 = vunpack.c.h.b16 %v68
    %v117 = vunpack.c.l.b16 %v69
    %v118 = vunpack.c.h.b16 %v69
    %v119 = vunpack.c.l.b16 %v70
    %v120 = vunpack.c.h.b16 %v70
    %v121 = vunpack.c.l.b16 %v71
    %v122 = vunpack.c.h.b16 %v71
    %v123 = vunpack.c.l.b16 %v72
    %v124 = vunpack.c.h.b16 %v72
    %v125 = vunpack.c.l.b16 %v73
    %v126 = vunpack.c.h.b16 %v73
    %v127 = vunpack.c.l.b16 %v74
    %v128 = vunpack.c.h.b16 %v74
    %v129 = vunpack.c.l.b16 %v75
    %v130 = vunpack.c.h.b16 %v75
    %v131 = vunpack.c.l.b16 %v76
    %v132 = vunpack.c.h.b16 %v76
    %v133 = vunpack.c.l.b16 %v77
    %v134 = vunpack.c.h.b16 %v77
    %v135 = vunpack.c.l.b16 %v78
    %v136 = vunpack.c.h.b16 %v78
    %v137 = vunpack.c.l.b16 %v79
    %v138 = vunpack.c.h.b16 %v79
    %v139 = vunpack.c.l.b16 %v80
    %v140 = vunpack.c.h.b16 %v80
    %v141 = vpack.c.b16 %v111, %v109
    %v142 = vpack.c.b16 %v112, %v110
    %v143 = vpack.c.b16 %v115, %v113
    %v144 = vpack.c.b16 %v116, %v114
    %v145 = vpack.c.b16 %v119, %v117
    %v146 = vpack.c.b16 %v120, %v118
    %v147 = vpack.c.b16 %v123, %v121
    %v148 = vpack.c.b16 %v124, %v122
    %v149 = vpack.c.b16 %v127, %v125
    %v150 = vpack.c.b16 %v128, %v126
    %v151 = vpack.c.b16 %v131, %v129
    %v152 = vpack.c.b16 %v132, %v130
    %v153 = vpack.c.b16 %v135, %v133
    %v154 = vpack.c.b16 %v136, %v134
    %v155 = vpack.c.b16 %v139, %v137
    %v156 = vpack.c.b16 %v140, %v138
    %173 = vmatprep.subr.bf16.mxu0 %v142
    %174 = vmatpush1.bf16.msra.mxu0 %v141
    %175 = vmatprep.subr.bf16.mxu0 %v144
    %176 = vmatpush1.bf16.msra.mxu0 %v143
    %177 = vmatprep.subr.bf16.mxu0 %v146
    %178 = vmatpush1.bf16.msra.mxu0 %v145
    %179 = vmatprep.subr.bf16.mxu0 %v148
    %180 = vmatpush1.bf16.msra.mxu0 %v147
    %181 = vmatprep.subr.bf16.mxu0 %v150
    %182 = vmatpush1.bf16.msra.mxu0 %v149
    %183 = vmatprep.subr.bf16.mxu0 %v152
    %184 = vmatpush1.bf16.msra.mxu0 %v151
    %185 = vmatprep.subr.bf16.mxu0 %v154
    %186 = vmatpush1.bf16.msra.mxu0 %v153
    %187 = vmatprep.subr.bf16.mxu0 %v156
    %188 = vmatpush1.bf16.msra.mxu0 %v155
    %189 = vmatprep.subr.bf16.mxu0 0
    %190 = vmatpush1.bf16.msra.mxu0 0
    %191 = vmatprep.subr.bf16.mxu0 0
    %192 = vmatpush1.bf16.msra.mxu0 0
    %193 = vmatprep.subr.bf16.mxu0 0
    %194 = vmatpush1.bf16.msra.mxu0 0
    %195 = vmatprep.subr.bf16.mxu0 0
    %196 = vmatpush1.bf16.msra.mxu0 0
    %197 = vmatprep.subr.bf16.mxu0 0
    %198 = vmatpush1.bf16.msra.mxu0 0
    %199 = vmatprep.subr.bf16.mxu0 0
    %200 = vmatpush1.bf16.msra.mxu0 0
    %201 = vmatprep.subr.bf16.mxu0 0
    %202 = vmatpush1.bf16.msra.mxu0 0
    %203 = vmatprep.subr.bf16.mxu0 0
    %204 = vmatpush1.bf16.msra.mxu0 0
    %205 = vmatprep.mubr.bf16.mxu0 0
    %206 = vmatmul.mubr.bf16.gmra.mrb[0].mxu0 %v89
    %v207 = vpop.f32.mrb[0].mxu0
    %v208 = vadd.f32 0.0, %v207
    %v209 = vpop.f32.mrb[0].mxu0
    %v210 = vadd.f32 0.0, %v209
    %v211 = vpop.f32.mrb[0].mxu0
    %v212 = vadd.f32 0.0, %v211
    %v213 = vpop.f32.mrb[0].mxu0
    %v214 = vadd.f32 0.0, %v213
    %215 = vmatprep.mubr.bf16.mxu0 0
    %216 = vmatmul.mubr.bf16.gmra.mrb[0].mxu0 %v90
    %v217 = vpop.f32.mrb[0].mxu0
    %v218 = vadd.f32 0.0, %v217
    %v219 = vpop.f32.mrb[0].mxu0
    %v220 = vadd.f32 0.0, %v219
    %v221 = vpop.f32.mrb[0].mxu0
    %v222 = vadd.f32 0.0, %v221
    %v223 = vpop.f32.mrb[0].mxu0
    %v224 = vadd.f32 0.0, %v223
    %225 = vdwg.mxu0
    %v226 = vadd.f32 %v53, %v208
    %v227 = vadd.f32 %v54, %v210
    %v228 = vadd.f32 %v55, %v212
    %v229 = vadd.f32 %v56, %v214
    %v230 = vadd.f32 %v57, %v218
    %v231 = vadd.f32 %v58, %v220
    %v232 = vadd.f32 %v59, %v222
    %v233 = vadd.f32 %v60, %v224
    %234 = vst [vmem:[#allocation2] sm:$0xff] %v226
    %235 = vst [vmem:[#allocation2 + $0x8] sm:$0xff] %v227
    %236 = vst [vmem:[#allocation2 + $0x10] sm:$0xff] %v228
    %237 = vst [vmem:[#allocation2 + $0x18] sm:$0xff] %v229
    %238 = vst [vmem:[#allocation2 + $0x20] sm:$0xff] %v230
    %239 = vst [vmem:[#allocation2 + $0x28] sm:$0xff] %v231
    %240 = vst [vmem:[#allocation2 + $0x30] sm:$0xff] %v232
    %241 = vst [vmem:[#allocation2 + $0x38] sm:$0xff] %v233
    // Predicated region
    $region22: #{tpu_custom_call.1} parent=1 // pred_check
      %p242 = pneg %p41
    $region23: #{tpu_custom_call.1} parent=1 // pred_check_branch
      %244 = sbr.rel (%p242) target = $region25
    $region24: #{tpu_custom_call.1} parent=1 // pred_region
      %v245 = vld [vmem:[#allocation2] sm:$0xff]
      %v246 = vld [vmem:[#allocation2 + $0x8] sm:$0xff]
      %v247 = vld [vmem:[#allocation2 + $0x10] sm:$0xff]
      %v248 = vld [vmem:[#allocation2 + $0x18] sm:$0xff]
      %v249 = vld [vmem:[#allocation2 + $0x20] sm:$0xff]
      %v250 = vld [vmem:[#allocation2 + $0x28] sm:$0xff]
      %v251 = vld [vmem:[#allocation2 + $0x30] sm:$0xff]
      %v252 = vld [vmem:[#allocation2 + $0x38] sm:$0xff]
      %v253 = vpack.c.bf16 %v247, %v245
      %v254 = vpack.c.bf16 %v248, %v246
      %v255 = vpack.c.bf16 %v251, %v249
      %v256 = vpack.c.bf16 %v252, %v250
      %v261 = vunpack.c.l.b16 %v253
      %v262 = vunpack.c.l.b16 %v254
      %v263 = vunpack.c.h.b16 %v253
      %v264 = vunpack.c.h.b16 %v254
      %v265 = vunpack.c.l.b16 %v255
      %v266 = vunpack.c.l.b16 %v256
      %v267 = vunpack.c.h.b16 %v255
      %v268 = vunpack.c.h.b16 %v256
      %v269 = vpack.c.b16 %v262, %v261
      %v270 = vpack.c.b16 %v264, %v263
      %v271 = vpack.c.b16 %v266, %v265
      %v272 = vpack.c.b16 %v268, %v267
      %277 = vst [vmem:[#allocation8] sm:$0xff] %v269
      %278 = vst [vmem:[#allocation8 + $0x8] sm:$0xff] %v270
      %279 = vst [vmem:[#allocation8 + $0x10] sm:$0xff] %v271
      %280 = vst [vmem:[#allocation8 + $0x18] sm:$0xff] %v272
    $region25: #{tpu_custom_call.1} parent=1 // pred_fallthru
      _
    // Predicated region
    $region26: #{tpu_custom_call.1} parent=1 // pred_check
      _
    $region27: #{tpu_custom_call.1} parent=1 // pred_check_branch
      %282 = sbr.rel (0) target = $region29
    $region28: #{tpu_custom_call.1} parent=1 // pred_region
      %s284 = ssub.s32 512, 512
      %285 = vsyncadd [#allocation5], %s284
      %s286 = sshll.u32 [#allocation8], 4
      %s287 = int_to_ptr.vmem [resolvable:$true] %s286
      %292 = dma.vmem_to_hbm [thread:$0]  %s287, 512, %s2, [#allocation5], 128, 128, 8
    $region29: #{tpu_custom_call.1} parent=1 // pred_fallthru
      _
    // Predicated region
    $region30: #{tpu_custom_call.1} parent=1 // pred_check
      _
    $region31: #{tpu_custom_call.1} parent=1 // pred_check_branch
      %294 = sbr.rel (0) target = $region33
    $region32: #{tpu_custom_call.1} parent=1 // pred_region
      %295 = dma.done [#allocation5], 512
    $region33: #{tpu_custom_call.1} parent=1 // pred_fallthru
      _
    %296 = vsyncpa [#allocation4], 1
    %297 = vsyncpa [#allocation7], 1
    %298 = vsyncpa [#allocation5], 1

</llo_original>
